<compile_context>
chip_gen: v7x
topology: tpu7x:2x2x1
jax: 0.10.0
libtpu: 0.0.40
codegen_flags: <defaults>
</compile_context>

<pallas_src>
import functools

import jax
import jax.numpy as jnp
import numpy as np
from jax.experimental import pallas as pl
from jax.experimental.pallas import tpu as pltpu

_LANES = 128


def make_sigmoid_poly_coeffs(order: int, a: float) -> np.ndarray:
    """Same deterministic coefficient fit as the PyTorch module __init__."""
    if order < 2 or order > 10:
        raise SystemExit("Order can't be <2 or >10")
    xs = np.arange(-a, a, 0.001)
    # np.polyfit returns highest-degree first; module flips to lowest-first.
    coeffs = np.flip(np.polyfit(xs, 1.0 / (1.0 + np.exp(-xs)), order))
    return np.ascontiguousarray(coeffs)  # shape (order+1,), float64


def _poly_kernel(x_ref, o_ref, *, coeffs):
    # coeffs is a static Python tuple (lowest degree first) baked into the kernel.
    x = x_ref[...]
    if x.dtype != jnp.float32:
        # Keep VALU math in f32 on every generation (v5e has no bf16 VPU).
        x = x.astype(jnp.float32)
    # Horner evaluation started as x*c_n + c_{n-1}: no vector splat of the
    # leading coefficient (order >= 2 guarantees len(coeffs) >= 3).
    out = x * jnp.float32(coeffs[-1]) + jnp.float32(coeffs[-2])
    for c in coeffs[-3::-1]:
        out = out * x + jnp.float32(c)
    o_ref[...] = out.astype(o_ref.dtype)


@functools.lru_cache(maxsize=None)
def _default_block_bytes() -> int:
    """~4 MiB blocks on v6e/v7x (32 MiB scoped-VMEM default), ~2 MiB otherwise.

    In+out double-buffered footprint is ~4x block bytes, so 4 MiB blocks would
    hit v5e's 16 MiB scoped-VMEM default exactly; 2 MiB stays safely inside
    while still amortizing the ~0.35 us per-grid-step overhead.
    """
    try:
        kind = jax.devices()[0].device_kind.lower()
    except Exception:
        return 2 << 20
    if "v6" in kind or "v7" in kind or "tpu7" in kind or "7x" in kind:
        return 4 << 20
    return 2 << 20


def _min_sublane(in_dtype, out_dtype) -> int:
    """Packed sublane multiple: 8 for 4-byte, 16 for 2-byte, 32 for 1-byte."""
    itemsize = min(jnp.dtype(in_dtype).itemsize, jnp.dtype(out_dtype).itemsize)
    return max(8, 32 // max(1, int(itemsize)))


def _choose_tile_rows(rows: int, row_bytes: int, sublane: int,
                      target_bytes: int) -> int:
    """Rows per block: ~target_bytes per block, >=4 grid steps when worth it."""
    cap = max(sublane,
              (int(target_bytes) // max(1, int(row_bytes))) // sublane * sublane)
    if rows * row_bytes <= (512 << 10):
        return rows  # tiny: whole array as one full-extent block
    quarter = -(-rows // 4)                     # >=4 steps -> >=2 per v7x TC
    quarter = -(-quarter // sublane) * sublane  # packed-sublane multiple
    tile = min(cap, max(sublane, quarter))
    return rows if tile >= rows else tile


def _sigmoid_x_tiled_2d(x2d, coeffs, out_dtype, target_bytes):
    """Streaming path over a 2-D slab: row-tiled, cdiv grid, parallel axis."""
    rows, cols = (int(d) for d in x2d.shape)
    itemsize = max(jnp.dtype(x2d.dtype).itemsize, jnp.dtype(out_dtype).itemsize)
    sublane = _min_sublane(x2d.dtype, out_dtype)
    lane_pad = -(-cols // _LANES) * _LANES
    row_bytes = lane_pad * itemsize
    tile_rows = _choose_tile_rows(rows, row_bytes, sublane, target_bytes)
    grid = (pl.cdiv(rows, tile_rows),)

    kernel = functools.partial(_poly_kernel, coeffs=coeffs)
    return pl.pallas_call(
        kernel,
        out_shape=jax.ShapeDtypeStruct((rows, cols), out_dtype),
        grid=grid,
        # If xprof ever shows exposed input DMA (most likely on v5e), sweep
        # pipeline_mode=pl.Buffered(3) on this input spec.
        in_specs=[pl.BlockSpec((tile_rows, cols), lambda i: (i, 0))],
        out_specs=pl.BlockSpec((tile_rows, cols), lambda i: (i, 0)),
        compiler_params=pltpu.CompilerParams(
            dimension_semantics=("parallel",)),
    )(x2d)


def _sigmoid_x_whole(x2d, coeffs, out_dtype):
    """Single whole-array VMEM block (used only for tiny <128-element tails)."""
    kernel = functools.partial(_poly_kernel, coeffs=coeffs)
    return pl.pallas_call(
        kernel,
        out_shape=jax.ShapeDtypeStruct(x2d.shape, out_dtype),
    )(x2d)


def _sigmoid_x_fallback(x, coeffs, out_dtype, target_bytes):
    """Rare shapes: total size not a multiple of 128 AND trailing dim < 128.

    Runs the tiled kernel on the 128-aligned prefix and a tiny whole-block
    call on the <128-element tail; avoids a full-array jnp.pad of the input.
    """
    n = int(x.size)
    flat = jnp.ravel(x)
    n_main = (n // _LANES) * _LANES
    pieces = []
    if n_main:
        main = flat[:n_main].reshape(n_main // _LANES, _LANES)
        pieces.append(
            _sigmoid_x_tiled_2d(main, coeffs, out_dtype, target_bytes).reshape(-1))
    if n > n_main:
        tail = flat[n_main:].reshape(1, n - n_main)
        pieces.append(_sigmoid_x_whole(tail, coeffs, out_dtype).reshape(-1))
    out = pieces[0] if len(pieces) == 1 else jnp.concatenate(pieces)
    return out.reshape(x.shape)


def sigmoid_x(x: jax.Array, order: int = 4, a: float = 8.0,
              block_bytes: int | None = None, out_dtype=None) -> jax.Array:
    """Pallas elementwise polynomial-sigmoid. Output dtype matches input.

    NOTE: unclamped (matches the PyTorch module) -- only a valid sigmoid
    approximation for |x| <= a.
    """
    coeffs = tuple(float(c) for c in make_sigmoid_poly_coeffs(order, a))
    out_dtype = x.dtype if out_dtype is None else jnp.dtype(out_dtype)
    if x.size == 0:
        return jnp.zeros(x.shape, out_dtype)
    target = _default_block_bytes() if block_bytes is None else int(block_bytes)
    n = int(x.size)

    # Preferred path: free ravel/reshape to a lane-dense (rows, 128) slab.
    if n % _LANES == 0:
        x2d = jnp.ravel(x).reshape(n // _LANES, _LANES)
        return _sigmoid_x_tiled_2d(x2d, coeffs, out_dtype, target).reshape(x.shape)

    # Misaligned total but decent trailing dim: tile leading dims directly with
    # the full trailing dim as the lane axis (no pad/slice/concat at all).
    if x.ndim >= 2 and int(x.shape[-1]) >= _LANES:
        cols = int(x.shape[-1])
        itemsize = max(jnp.dtype(x.dtype).itemsize, jnp.dtype(out_dtype).itemsize)
        sublane = _min_sublane(x.dtype, out_dtype)
        row_bytes = (-(-cols // _LANES) * _LANES) * itemsize
        if sublane * row_bytes <= target:  # a sublane-high strip fits the budget
            x2d = x.reshape(n // cols, cols)
            return _sigmoid_x_tiled_2d(
                x2d, coeffs, out_dtype, target).reshape(x.shape)

    return _sigmoid_x_fallback(x, coeffs, out_dtype, target)


def sigmoid_x_ref(x: jax.Array, order: int = 4, a: float = 8.0) -> jax.Array:
    """Pure-JAX reference matching the PyTorch forward loop."""
    coeffs = make_sigmoid_poly_coeffs(order, a)
    xf = x.astype(jnp.float32)
    out = jnp.zeros_like(xf)
    for i in range(len(coeffs)):
        out = out + jnp.float32(coeffs[i]) * xf ** i
    return out.astype(x.dtype)


if __name__ == "__main__":
    order, a = 4, 8.0

    def _check(xin):
        out = jax.block_until_ready(sigmoid_x(xin, order=order, a=a))
        ref = sigmoid_x_ref(xin, order=order, a=a)
        np.testing.assert_allclose(np.asarray(out), np.asarray(ref),
                                   rtol=1e-5, atol=1e-5)
        assert out.shape == xin.shape and out.dtype == xin.dtype

    key = jax.random.PRNGKey(0)
    k0, k1, k2 = jax.random.split(key, 3)

    # NCHW input matching the module's intended use: 2048 elements -> free
    # reshape to a lane-dense (16, 128) slab, single block.
    _check(jax.random.normal(k0, (2, 4, 16, 16), dtype=jnp.float32) * 3.0)

    # Misaligned total with trailing dim >= 128: direct (999, 777) row tiling,
    # >=4 grid steps, masked partial last row-block, no pad/slice.
    _check(jax.random.normal(k1, (999, 777), dtype=jnp.float32) * 3.0)

    # Misaligned total with tiny trailing dim: aligned-prefix + tail fallback.
    _check(jax.random.normal(k2, (37, 5), dtype=jnp.float32) * 3.0)

    print("KERNEL_OK")
</pallas_src>

<mosaic_0001>
module attributes {stable_mosaic.version = 11 : i64} {
  func.func @_poly_kernel(%arg0: i32, %arg1: memref<16x128xf32, #tpu.memory_space<vmem>>, %arg2: memref<16x128xf32, #tpu.memory_space<vmem>>) attributes {dimension_semantics = [#tpu.dimension_semantics<parallel>], iteration_bounds = array<i64: 1>, scalar_prefetch = 0 : i64, scratch_operands = 0 : i64, tpu.core_type = #tpu.core_type<tc>, window_params = [{transform_indices = @transform_0, window_bounds = array<i64: 16, 128>}, {transform_indices = @transform_1, window_bounds = array<i64: 16, 128>}]} {
    %c0 = arith.constant 0 : index
    %c0_0 = arith.constant 0 : index
    %0 = vector.load %arg1[%c0, %c0_0] : memref<16x128xf32, #tpu.memory_space<vmem>>, vector<16x128xf32>
    %cst = arith.constant -6.86889123E-8 : f32
    %1 = vector.broadcast %cst : f32 to vector<16x128xf32>
    %2 = arith.mulf %0, %1 : vector<16x128xf32>
    %cst_1 = arith.constant -0.0015930176 : f32
    %3 = vector.broadcast %cst_1 : f32 to vector<16x128xf32>
    %4 = arith.addf %2, %3 : vector<16x128xf32>
    %5 = arith.mulf %4, %0 : vector<16x128xf32>
    %cst_2 = arith.constant 2.93072685E-6 : f32
    %6 = vector.broadcast %cst_2 : f32 to vector<16x128xf32>
    %7 = arith.addf %5, %6 : vector<16x128xf32>
    %8 = arith.mulf %7, %0 : vector<16x128xf32>
    %cst_3 = arith.constant 0.150120422 : f32
    %9 = vector.broadcast %cst_3 : f32 to vector<16x128xf32>
    %10 = arith.addf %8, %9 : vector<16x128xf32>
    %11 = arith.mulf %10, %0 : vector<16x128xf32>
    %cst_4 = arith.constant 0.499986589 : f32
    %12 = vector.broadcast %cst_4 : f32 to vector<16x128xf32>
    %13 = arith.addf %11, %12 : vector<16x128xf32>
    %c0_5 = arith.constant 0 : index
    %c0_6 = arith.constant 0 : index
    %14 = vector.load %arg2[%c0_5, %c0_6] : memref<16x128xf32, #tpu.memory_space<vmem>>, vector<16x128xf32>
    tpu.vector_store %arg2[%c0_5, %c0_6], %13 {strides = array<i32>} : memref<16x128xf32, #tpu.memory_space<vmem>>, vector<16x128xf32>,
    return
  }
  func.func @transform_0(%arg0: i32) -> (i32, i32) {
    %c0_i32 = arith.constant 0 : i32
    %c0_i32_0 = arith.constant 0 : i32
    return %arg0, %c0_i32 : i32, i32
  }
  func.func @transform_1(%arg0: i32) -> (i32, i32) {
    %c0_i32 = arith.constant 0 : i32
    %c0_i32_0 = arith.constant 0 : i32
    return %arg0, %c0_i32 : i32, i32
  }
}

</mosaic_0001>

<llo_original>
// kernel: tpu_custom_call.1
$region0: #{tpu_custom_call.1}
  #allocation0 [shape = 'u32[]', space=smem, size = 0x4, offset = 0x4, fixed_abs, tag = 'smem constant byte address 0x4 - core index']
  #allocation1 [shape = 'u32[144,128]{1,0:T(1,128)}', space=vmem, size = 0x12000, scoped, tag = 'internal scratch']
  %s0 = inlined_call_operand.hbm [shape: f32[16,128], index: 0, kind: input, shape index: {}]
  %s1 = inlined_call_operand.hbm [shape: f32[16,128], index: 1, kind: output, shape index: {}]
  %s2 = sld [smem:[#allocation0]]
  $region18: #{tpu_custom_call.1} parent=0
    _
  %s4 = ssub.s32 1, %s2
  %s5 = scalar_select 0, %s4, %s2
  $region1: #{tpu_custom_call.1} parent=0
    #allocation2 [shape = 'u8[8192]{0}', space=vmem, size = 0x2000, scoped, tag = 'input window, operand 0, single buffered']
    #allocation3 [shape = 's32[1]{0}', space=sflag, size = 0x4, scoped, tag = 'scoped memory for tpu_custom_call.1']
    #allocation4 [shape = 's32[1]{0}', space=sflag, size = 0x4, scoped, tag = 'scoped memory for tpu_custom_call.1']
    #allocation5 [shape = 'u8[8192]{0}', space=vmem, size = 0x2000, scoped, tag = 'output window, operand 0, single buffered']
    %6 = vsyncpa [#allocation3], 0
    %7 = vsyncpa [#allocation4], 0
    // Predicated region
    $region2: #{tpu_custom_call.1} parent=1 // pred_check
      _
    $region3: #{tpu_custom_call.1} parent=1 // pred_check_branch
      %9 = sbr.rel (0) target = $region5
    $region4: #{tpu_custom_call.1} parent=1 // pred_region
      %s11 = ssub.s32 256, 256
      %12 = vsyncadd [#allocation3], %s11
      %s13 = sshll.u32 [#allocation2], 4
      %s14 = int_to_ptr.vmem [resolvable:$true] %s13
      %19 = dma.hbm_to_vmem [thread:$0]  %s0, 256, %s14, [#allocation3], 128, 128, 8
    $region5: #{tpu_custom_call.1} parent=1 // pred_fallthru
      _
    // Predicated region
    $region6: #{tpu_custom_call.1} parent=1 // pred_check
      _
    $region7: #{tpu_custom_call.1} parent=1 // pred_check_branch
      %21 = sbr.rel (0) target = $region9
    $region8: #{tpu_custom_call.1} parent=1 // pred_region
      %22 = dma.done [#allocation3], 256
    $region9: #{tpu_custom_call.1} parent=1 // pred_fallthru
      _
    %v23 = vld [vmem:[#allocation2] sm:$0xff]
    %v24 = vld [vmem:[#allocation2 + $0x8] sm:$0xff]
    %v25 = vmul.f32 %v23, -6.868891e-08
    %v26 = vmul.f32 %v24, -6.868891e-08
    %v27 = vadd.f32 %v25, -0.0015930176
    %v28 = vadd.f32 %v26, -0.0015930176
    %v29 = vmul.f32 %v27, %v23
    %v30 = vmul.f32 %v28, %v24
    %v31 = vadd.f32 %v29, 2.9307269e-06
    %v32 = vadd.f32 %v30, 2.9307269e-06
    %v33 = vmul.f32 %v31, %v23
    %v34 = vmul.f32 %v32, %v24
    %v35 = vadd.f32 %v33, 0.15012042
    %v36 = vadd.f32 %v34, 0.15012042
    %v37 = vmul.f32 %v35, %v23
    %v38 = vmul.f32 %v36, %v24
    %v39 = vadd.f32 %v37, 0.4999866
    %v40 = vadd.f32 %v38, 0.4999866
    %41 = vst [vmem:[#allocation5] sm:$0xff] %v39
    %42 = vst [vmem:[#allocation5 + $0x8] sm:$0xff] %v40
    // Predicated region
    $region10: #{tpu_custom_call.1} parent=1 // pred_check
      _
    $region11: #{tpu_custom_call.1} parent=1 // pred_check_branch
      %44 = sbr.rel (0) target = $region13
    $region12: #{tpu_custom_call.1} parent=1 // pred_region
      %s46 = ssub.s32 256, 256
      %47 = vsyncadd [#allocation4], %s46
      %s48 = sshll.u32 [#allocation5], 4
      %s49 = int_to_ptr.vmem [resolvable:$true] %s48
      %54 = dma.vmem_to_hbm [thread:$0]  %s49, 256, %s1, [#allocation4], 128, 128, 8
    $region13: #{tpu_custom_call.1} parent=1 // pred_fallthru
      _
    // Predicated region
    $region14: #{tpu_custom_call.1} parent=1 // pred_check
      _
    $region15: #{tpu_custom_call.1} parent=1 // pred_check_branch
      %56 = sbr.rel (0) target = $region17
    $region16: #{tpu_custom_call.1} parent=1 // pred_region
      %57 = dma.done [#allocation4], 256
    $region17: #{tpu_custom_call.1} parent=1 // pred_fallthru
      _
    %58 = vsyncpa [#allocation3], 1
    %59 = vsyncpa [#allocation4], 1

</llo_original>
